<compile_context>
chip_gen: v7x
topology: tpu7x:2x2x1
jax: 0.10.0
libtpu: 0.0.40
codegen_flags: <defaults>
</compile_context>

<pallas_src>
import numpy as np
import jax
import jax.numpy as jnp
from jax.experimental import pallas as pl
from jax.experimental.pallas import tpu as pltpu


def _logit_scale_kernel(scale_ref, x_ref, o_ref):
    # scale_ref: SMEM (1,) f32 holding exp(logit_scale) (exp hoisted to wrapper).
    # The broadcast multiply runs on the VPU; bf16 inputs promote to f32 for the
    # multiply and are cast back on store.
    o_ref[...] = (x_ref[...] * scale_ref[0]).astype(o_ref.dtype)


def logit_scale_forward(x, logit_scale_param, *,
                        target_block_bytes=2 * 1024 * 1024,
                        max_lane_width=4096,
                        donate_input=False):
    """out = x * exp(logit_scale_param) via a Pallas TPU kernel.

    x: any-rank array (f32 / bf16 / ...).
    logit_scale_param: scalar raw parameter (pre-exp), kept in f32 for precision.
    donate_input: alias the output onto x's HBM buffer (only if x is dead after).
    """
    orig_shape = x.shape
    dtype = x.dtype
    itemsize = int(np.dtype(dtype).itemsize)
    total = int(np.prod(orig_shape)) if orig_shape else 1

    # exp() hoisted out of the kernel: a single scalar XLA op, f32 for precision.
    scale = jnp.exp(jnp.asarray(logit_scale_param, dtype=jnp.float32)).reshape((1,))

    # Collapse to a 2-D view (row-major, so the reshape is free in HBM).
    if x.ndim >= 2:
        cols = orig_shape[-1]
        rows = total // cols
    else:
        rows, cols = 1, total
    # Lane-widening: fold leading rows into the lane axis while it divides
    # evenly, so narrow hidden dims still give wide, unmasked vector stores.
    while cols < max_lane_width and rows > 1 and rows % 2 == 0:
        rows //= 2
        cols *= 2
    x2 = x.reshape(rows, cols)

    # Batch tile: biggest block under the VMEM budget. Double-buffered input +
    # output => ~4x block bytes of scoped VMEM.
    row_bytes = max(cols * itemsize, 1)
    tm = max(1, target_block_bytes // row_bytes)
    if tm >= rows:
        tm = rows                              # full leading dim in one block
    else:
        tm = max(8, (tm // 8) * 8)             # sublane dim must be multiple of 8
    # If one block would swallow the whole array, split it so v7x's two
    # TensorCores each get a grid step (parallel axis shards across cores).
    if tm == rows and rows >= 16:
        half = rows // 2
        tm = half if half % 8 == 0 else max(8, (half // 8) * 8)

    grid = (pl.cdiv(rows, tm),)

    # Raise scoped VMEM only if a single (forced) block exceeds v5e's default.
    block_bytes = tm * cols * itemsize
    vmem_limit = None
    if 4 * block_bytes > 16 * 1024 * 1024:
        vmem_limit = min(4 * block_bytes + (4 << 20), 48 << 20)

    out2 = pl.pallas_call(
        _logit_scale_kernel,
        out_shape=jax.ShapeDtypeStruct((rows, cols), dtype),
        grid_spec=pltpu.PrefetchScalarGridSpec(
            num_scalar_prefetch=0,
            grid=grid,
            in_specs=[
                pl.BlockSpec(memory_space=pltpu.SMEM),           # exp(scale) scalar
                pl.BlockSpec((tm, cols), lambda i: (i, 0)),      # x tile
            ],
            out_specs=pl.BlockSpec((tm, cols), lambda i: (i, 0)),
        ),
        compiler_params=pltpu.CompilerParams(
            dimension_semantics=("parallel",),
            vmem_limit_bytes=vmem_limit,
        ),
        cost_estimate=pl.CostEstimate(
            flops=total,
            transcendentals=0,
            bytes_accessed=2 * total * itemsize + 4,
        ),
        input_output_aliases=({1: 0} if donate_input else {}),
    )(scale, x2)

    return out2.reshape(orig_shape)


if __name__ == "__main__":
    # Deterministic parameter init mirroring
    # nn.Parameter(torch.ones([]) * np.log(config.logit_scale)), CLIP-style.
    config_logit_scale = 1.0 / 0.07
    logit_scale_param = jnp.float32(np.log(config_logit_scale))
    scale_f32 = jnp.exp(logit_scale_param)

    key = jax.random.PRNGKey(0)
    k1, k2, k3 = jax.random.split(key, 3)

    # 1) f32 embeddings, narrow hidden dim -> exercises lane-widening reshape.
    x1 = jax.random.normal(k1, (16, 128), dtype=jnp.float32)
    o1 = jax.block_until_ready(logit_scale_forward(x1, logit_scale_param))
    r1 = x1 * scale_f32
    np.testing.assert_allclose(np.asarray(o1), np.asarray(r1), rtol=1e-6, atol=1e-6)

    # 2) Odd, non-aligned shape -> exercises full-dim blocks / cdiv grid.
    x2 = jax.random.normal(k2, (7, 96), dtype=jnp.float32)
    o2 = jax.block_until_ready(logit_scale_forward(x2, logit_scale_param))
    r2 = x2 * scale_f32
    np.testing.assert_allclose(np.asarray(o2), np.asarray(r2), rtol=1e-6, atol=1e-6)

    # 3) bf16, 3-D input -> exercises dtype promotion + cast-back on store.
    x3 = jax.random.normal(k3, (2, 8, 256), dtype=jnp.float32).astype(jnp.bfloat16)
    o3 = jax.block_until_ready(logit_scale_forward(x3, logit_scale_param))
    r3 = (x3.astype(jnp.float32) * scale_f32).astype(jnp.bfloat16)
    np.testing.assert_allclose(
        np.asarray(o3.astype(jnp.float32)),
        np.asarray(r3.astype(jnp.float32)),
        rtol=2e-2, atol=2e-2,
    )

    print("KERNEL_OK")
</pallas_src>

<mosaic_0001>
module attributes {stable_mosaic.version = 11 : i64} {
  func.func @_logit_scale_kernel(%arg0: i32, %arg1: memref<1xf32, #tpu.memory_space<smem>>, %arg2: memref<1x2048xf32, #tpu.memory_space<vmem>>, %arg3: memref<1x2048xf32, #tpu.memory_space<vmem>>) attributes {dimension_semantics = [#tpu.dimension_semantics<parallel>], iteration_bounds = array<i64: 1>, scalar_prefetch = 0 : i64, scratch_operands = 0 : i64, tpu.core_type = #tpu.core_type<tc>, window_params = [{transform_indices = @transform_0, window_bounds = array<i64: 1>}, {transform_indices = @transform_1, window_bounds = array<i64: 1, 2048>}, {transform_indices = @transform_2, window_bounds = array<i64: 1, 2048>}]} {
    %c0 = arith.constant 0 : index
    %c0_0 = arith.constant 0 : index
    %0 = vector.load %arg2[%c0, %c0_0] : memref<1x2048xf32, #tpu.memory_space<vmem>>, vector<1x2048xf32>
    %c0_1 = arith.constant 0 : index
    %1 = memref.load %arg1[%c0_1] : memref<1xf32, #tpu.memory_space<smem>>
    %2 = vector.broadcast %1 : f32 to vector<1x2048xf32>
    %3 = arith.mulf %0, %2 : vector<1x2048xf32>
    %c0_2 = arith.constant 0 : index
    %c0_3 = arith.constant 0 : index
    %4 = vector.load %arg3[%c0_2, %c0_3] : memref<1x2048xf32, #tpu.memory_space<vmem>>, vector<1x2048xf32>
    tpu.vector_store %arg3[%c0_2, %c0_3], %3 {strides = array<i32>} : memref<1x2048xf32, #tpu.memory_space<vmem>>, vector<1x2048xf32>,
    return
  }
  func.func @transform_0(%arg0: i32) -> i32 {
    %c0_i32 = arith.constant 0 : i32
    %c0_i32_0 = arith.constant 0 : i32
    return %c0_i32 : i32
  }
  func.func @transform_1(%arg0: i32) -> (i32, i32) {
    %c0_i32 = arith.constant 0 : i32
    %c0_i32_0 = arith.constant 0 : i32
    return %arg0, %c0_i32 : i32, i32
  }
  func.func @transform_2(%arg0: i32) -> (i32, i32) {
    %c0_i32 = arith.constant 0 : i32
    %c0_i32_0 = arith.constant 0 : i32
    return %arg0, %c0_i32 : i32, i32
  }
}

</mosaic_0001>

<llo_original>
// kernel: tpu_custom_call.1
$region0: #{tpu_custom_call.1}
  #allocation0 [shape = 'u32[]', space=smem, size = 0x4, offset = 0x4, fixed_abs, tag = 'smem constant byte address 0x4 - core index']
  #allocation1 [shape = 'u32[144,128]{1,0:T(1,128)}', space=vmem, size = 0x12000, scoped, tag = 'internal scratch']
  #allocation2 [shape = 'f32[1]{0:T(128)S(6)}', space=smem, size = 0x200, scoped, tag = 'scoped memory for tpu_custom_call.1']
  %s0 = inlined_call_operand.<no memory space> [shape: f32[1], index: 0, kind: input, shape index: {}]
  %s1 = inlined_call_operand.hbm [shape: f32[1,2048], index: 1, kind: input, shape index: {}]
  %s2 = inlined_call_operand.hbm [shape: f32[1,2048], index: 2, kind: output, shape index: {}]
  %s3 = sld [smem:[#allocation0]]
  $region22: #{tpu_custom_call.1} parent=0
    _
  %s5 = ssub.s32 1, %s3
  %s6 = scalar_select 0, %s5, %s3
  %7 = sst [smem:[#allocation2]] %s0
  $region1: #{tpu_custom_call.1} parent=0
    #allocation3 [shape = 'u8[8192]{0}', space=vmem, size = 0x2000, scoped, tag = 'input window, operand 1, single buffered']
    #allocation4 [shape = 's32[1]{0}', space=sflag, size = 0x4, scoped, tag = 'scoped memory for tpu_custom_call.1']
    #allocation5 [shape = 's32[1]{0}', space=sflag, size = 0x4, scoped, tag = 'scoped memory for tpu_custom_call.1']
    #allocation6 [shape = 'u8[8192]{0}', space=vmem, size = 0x2000, scoped, tag = 'output window, operand 0, single buffered']
    %8 = vsyncpa [#allocation4], 0
    %9 = vsyncpa [#allocation5], 0
    // Predicated region
    $region2: #{tpu_custom_call.1} parent=1 // pred_check
      _
    $region3: #{tpu_custom_call.1} parent=1 // pred_check_branch
      %11 = sbr.rel (0) target = $region5
    $region4: #{tpu_custom_call.1} parent=1 // pred_region
      _
    $region5: #{tpu_custom_call.1} parent=1 // pred_fallthru
      _
    // Predicated region
    $region6: #{tpu_custom_call.1} parent=1 // pred_check
      _
    $region7: #{tpu_custom_call.1} parent=1 // pred_check_branch
      %13 = sbr.rel (0) target = $region9
    $region8: #{tpu_custom_call.1} parent=1 // pred_region
      %s15 = ssub.s32 256, 256
      %16 = vsyncadd [#allocation4], %s15
      %s18 = sshll.u32 [#allocation3], 4
      %s19 = int_to_ptr.vmem [resolvable:$true] %s18
      %21 = dma.hbm_to_vmem [thread:$0]  %s1, 256, %s19, [#allocation4]
    $region9: #{tpu_custom_call.1} parent=1 // pred_fallthru
      _
    // Predicated region
    $region10: #{tpu_custom_call.1} parent=1 // pred_check
      _
    $region11: #{tpu_custom_call.1} parent=1 // pred_check_branch
      %23 = sbr.rel (0) target = $region13
    $region12: #{tpu_custom_call.1} parent=1 // pred_region
      %24 = dma.done [#allocation4], 256
    $region13: #{tpu_custom_call.1} parent=1 // pred_fallthru
      _
    %v25 = vld [vmem:[#allocation3] sm:$0xff]
    %v26 = vld [vmem:[#allocation3 + $0x8] sm:$0xff]
    %s27 = sld [smem:[#allocation2]]
    %v28 = vstv %s27
    %v29 = vmul.f32 %v25, %v28
    %v30 = vmul.f32 %v26, %v28
    %31 = vst [vmem:[#allocation6] sm:$0xff] %v29
    %32 = vst [vmem:[#allocation6 + $0x8] sm:$0xff] %v30
    // Predicated region
    $region14: #{tpu_custom_call.1} parent=1 // pred_check
      _
    $region15: #{tpu_custom_call.1} parent=1 // pred_check_branch
      %34 = sbr.rel (0) target = $region17
    $region16: #{tpu_custom_call.1} parent=1 // pred_region
      %s36 = ssub.s32 256, 256
      %37 = vsyncadd [#allocation5], %s36
      %s39 = sshll.u32 [#allocation6], 4
      %s40 = int_to_ptr.vmem [resolvable:$true] %s39
      %42 = dma.vmem_to_hbm [thread:$0]  %s40, 256, %s2, [#allocation5]
    $region17: #{tpu_custom_call.1} parent=1 // pred_fallthru
      _
    // Predicated region
    $region18: #{tpu_custom_call.1} parent=1 // pred_check
      _
    $region19: #{tpu_custom_call.1} parent=1 // pred_check_branch
      %44 = sbr.rel (0) target = $region21
    $region20: #{tpu_custom_call.1} parent=1 // pred_region
      %45 = dma.done [#allocation5], 256
    $region21: #{tpu_custom_call.1} parent=1 // pred_fallthru
      _
    %46 = vsyncpa [#allocation4], 1
    %47 = vsyncpa [#allocation5], 1

</llo_original>
